<compile_context>
chip_gen: v5e
topology: v5e:2x2
jax: 0.10.0
libtpu: 0.0.40
codegen_flags: <defaults>
</compile_context>

<pallas_src>
import jax
import jax.numpy as jnp
from jax.experimental import pallas as pl
from jax.experimental.pallas import tpu as pltpu


def _make_policy_sum_kernel(batch, tb):
    """Per-block partial of sum(-p * log(1e-6 + yp)) with tail-row masking."""

    def kernel(y_policy_ref, policy_ref, out_ref):
        i = pl.program_id(0)
        # Global row index of every element in this block (sublane axis).
        rows = jax.lax.broadcasted_iota(jnp.int32, y_policy_ref.shape, 0)
        valid = (i * tb + rows) < batch

        yp = y_policy_ref[...].astype(jnp.float32)
        p = policy_ref[...].astype(jnp.float32)
        t = -p * jnp.log(1e-6 + yp)
        # Mask AFTER the product: undefined data in the OOB tail rows may
        # produce NaN/inf in `t`, but select replaces it with 0.
        t = jnp.where(valid, t, 0.0)
        out_ref[...] = jnp.sum(t, keepdims=True)

    return kernel


def alpha_loss(y_value, value, y_policy, policy, *, block_rows=None,
               target_block_bytes=8 * 1024 * 1024):
    """Pallas implementation of AlphaLoss.forward. Returns a scalar f32."""
    B = value.shape[0]
    P = policy.shape[1]
    assert y_value.shape == (B, 1) and value.shape == (B, 1)
    assert y_policy.shape == (B, P) and policy.shape == (B, P)

    itemsize = jnp.dtype(policy.dtype).itemsize
    # Native sublane packing: 8 rows for 4-byte, 16 for 2-byte, 32 for 1-byte.
    sub = max(8, 32 // itemsize)

    # --- pick a batch tile (multiple of `sub`, ~target_block_bytes per block)
    if block_rows is None:
        tb = max(sub, (target_block_bytes // (P * itemsize)) // sub * sub)
    else:
        tb = max(sub, (block_rows // sub) * sub)

    yp_in, p_in = y_policy, policy
    if B >= sub:
        # Cap the block so it never exceeds the array rows; the ragged tail of
        # the last block (if any) is masked inside the kernel -- no big pads.
        tb = min(tb, (B // sub) * sub)
    else:
        # Degenerate tiny batch: pad up to one sublane tile (a few rows, cheap).
        tb = sub
        pad = sub - B
        yp_in = jnp.pad(y_policy, ((0, pad), (0, 0)))
        p_in = jnp.pad(policy, ((0, pad), (0, 0)))
    g = pl.cdiv(max(B, sub), tb)

    # Explicit VMEM budget: 2 inputs x 2 pipeline buffers + slack, capped so the
    # same config is safe on v7x (64 MiB physical per TC) as well as v5e/v6e.
    block_bytes = tb * P * itemsize
    vmem_limit = int(min(48 * 1024 * 1024,
                         max(16 * 1024 * 1024, 4 * block_bytes + 4 * 1024 * 1024)))

    kernel = _make_policy_sum_kernel(B, tb)

    partials = pl.pallas_call(
        kernel,
        out_shape=jax.ShapeDtypeStruct((g, 1), jnp.float32),
        grid_spec=pltpu.PrefetchScalarGridSpec(
            num_scalar_prefetch=0,
            grid=(g,),
            in_specs=[
                pl.BlockSpec((tb, P), lambda i: (i, 0)),   # y_policy
                pl.BlockSpec((tb, P), lambda i: (i, 0)),   # policy
            ],
            out_specs=pl.BlockSpec((1, 1), lambda i: (i, 0)),
        ),
        compiler_params=pltpu.CompilerParams(
            # Independent per-block partials -> fully parallel (2 TCs on v7x).
            dimension_semantics=("parallel",),
            vmem_limit_bytes=vmem_limit,
        ),
        cost_estimate=pl.CostEstimate(
            flops=4 * B * P,
            transcendentals=B * P,
            bytes_accessed=2 * B * P * itemsize + 2 * B * 4 + g * 4,
        ),
    )(yp_in, p_in)

    # Tiny value term (B elements) in plain JAX, per perf review: avoids the
    # 1-sublane (1, tb) DMAs the kernel used to do for the value inputs.
    dv = value.reshape(-1).astype(jnp.float32) - y_value.reshape(-1).astype(jnp.float32)
    value_sum = jnp.sum(dv * dv)

    return (jnp.sum(partials) + value_sum) * jnp.float32(1.0 / B)


def _alpha_loss_ref(y_value, value, y_policy, policy):
    ve = (value.astype(jnp.float32) - y_value.astype(jnp.float32)) ** 2
    pe = jnp.sum(-policy.astype(jnp.float32)
                 * jnp.log(1e-6 + y_policy.astype(jnp.float32)), axis=1)
    return jnp.mean(ve.reshape(-1) + pe)


if __name__ == "__main__":
    key = jax.random.PRNGKey(0)

    # ---- case 1: small demo consistent with the module (B=8 samples, 128 actions)
    k1, k2, k3, k4, k5 = jax.random.split(key, 5)
    B, P = 8, 128
    value = jax.random.uniform(k1, (B, 1), jnp.float32, minval=-1.0, maxval=1.0)
    y_value = jax.random.uniform(k2, (B, 1), jnp.float32, minval=-1.0, maxval=1.0)
    policy = jax.nn.softmax(jax.random.normal(k3, (B, P), jnp.float32), axis=1)
    y_policy = jax.nn.softmax(jax.random.normal(k4, (B, P), jnp.float32), axis=1)

    loss = jax.block_until_ready(alpha_loss(y_value, value, y_policy, policy))
    ref = jax.block_until_ready(_alpha_loss_ref(y_value, value, y_policy, policy))
    assert jnp.allclose(loss, ref, rtol=1e-5, atol=1e-6), (loss, ref)

    # ---- case 2: ragged batch, multi-block grid (exercises in-kernel tail mask)
    ka, kb, kc, kd, ke = jax.random.split(k5, 5)
    B2, P2 = 37, 96
    value2 = jax.random.uniform(ka, (B2, 1), jnp.float32, minval=-1.0, maxval=1.0)
    y_value2 = jax.random.uniform(kb, (B2, 1), jnp.float32, minval=-1.0, maxval=1.0)
    policy2 = jax.nn.softmax(jax.random.normal(kc, (B2, P2), jnp.float32), axis=1)
    y_policy2 = jax.nn.softmax(jax.random.normal(kd, (B2, P2), jnp.float32), axis=1)

    loss2 = jax.block_until_ready(
        alpha_loss(y_value2, value2, y_policy2, policy2, block_rows=16))
    ref2 = jax.block_until_ready(
        _alpha_loss_ref(y_value2, value2, y_policy2, policy2))
    assert jnp.allclose(loss2, ref2, rtol=1e-5, atol=1e-6), (loss2, ref2)

    # ---- case 3: degenerate tiny batch (< one sublane tile) -> cheap tiny pad
    kf, kg, kh, ki = jax.random.split(ke, 4)
    B3, P3 = 5, 64
    value3 = jax.random.uniform(kf, (B3, 1), jnp.float32, minval=-1.0, maxval=1.0)
    y_value3 = jax.random.uniform(kg, (B3, 1), jnp.float32, minval=-1.0, maxval=1.0)
    policy3 = jax.nn.softmax(jax.random.normal(kh, (B3, P3), jnp.float32), axis=1)
    y_policy3 = jax.nn.softmax(jax.random.normal(ki, (B3, P3), jnp.float32), axis=1)

    loss3 = jax.block_until_ready(
        alpha_loss(y_value3, value3, y_policy3, policy3))
    ref3 = jax.block_until_ready(
        _alpha_loss_ref(y_value3, value3, y_policy3, policy3))
    assert jnp.allclose(loss3, ref3, rtol=1e-5, atol=1e-6), (loss3, ref3)

    print("KERNEL_OK")
</pallas_src>

<mosaic_0001>
module attributes {stable_mosaic.version = 11 : i64} {
  func.func @kernel(%arg0: i32, %arg1: memref<8x128xf32, #tpu.memory_space<vmem>>, %arg2: memref<8x128xf32, #tpu.memory_space<vmem>>, %arg3: memref<1x1xf32, #tpu.memory_space<vmem>>) attributes {dimension_semantics = [#tpu.dimension_semantics<parallel>], iteration_bounds = array<i64: 1>, scalar_prefetch = 0 : i64, scratch_operands = 0 : i64, tpu.core_type = #tpu.core_type<tc>, window_params = [{transform_indices = @transform_0, window_bounds = array<i64: 8, 128>}, {transform_indices = @transform_1, window_bounds = array<i64: 8, 128>}, {transform_indices = @transform_2, window_bounds = array<i64: 1, 1>}]} {
    %0 = tpu.iota {dimensions = array<i32: 0>} : vector<8x128xi32>
    %c8_i32 = arith.constant 8 : i32
    %1 = arith.muli %arg0, %c8_i32 : i32
    %2 = vector.broadcast %1 : i32 to vector<8x128xi32>
    %3 = arith.addi %2, %0 : vector<8x128xi32>
    %c8_i32_0 = arith.constant 8 : i32
    %4 = vector.broadcast %c8_i32_0 : i32 to vector<8x128xi32>
    %5 = arith.cmpi slt, %3, %4 : vector<8x128xi32>
    %c0 = arith.constant 0 : index
    %c0_1 = arith.constant 0 : index
    %6 = vector.load %arg1[%c0, %c0_1] : memref<8x128xf32, #tpu.memory_space<vmem>>, vector<8x128xf32>
    %c0_2 = arith.constant 0 : index
    %c0_3 = arith.constant 0 : index
    %7 = vector.load %arg2[%c0_2, %c0_3] : memref<8x128xf32, #tpu.memory_space<vmem>>, vector<8x128xf32>
    %cst = arith.constant 0.000000e+00 : f32
    %8 = vector.broadcast %cst : f32 to vector<8x128xf32>
    %9 = arith.subf %8, %7 : vector<8x128xf32>
    %cst_4 = arith.constant 9.99999997E-7 : f32
    %10 = vector.broadcast %cst_4 : f32 to vector<8x128xf32>
    %11 = arith.addf %10, %6 : vector<8x128xf32>
    %12 = math.log %11 : vector<8x128xf32>
    %13 = arith.mulf %9, %12 : vector<8x128xf32>
    %cst_5 = arith.constant 0.000000e+00 : f32
    %14 = vector.broadcast %cst_5 : f32 to vector<8x128xf32>
    %15 = arith.select %5, %13, %14 : vector<8x128xi1>, vector<8x128xf32>
    %16 = vector.shape_cast %15 : vector<8x128xf32> to vector<1x8x128xf32>
    %cst_6 = arith.constant dense<0.000000e+00> : vector<1xf32>
    %17 = vector.multi_reduction <add>, %16, %cst_6 [1, 2] : vector<1x8x128xf32> to vector<1xf32>
    %18 = vector.shape_cast %17 : vector<1xf32> to vector<1x1x1xf32>
    %19 = vector.extract %18[0, 0, 0] : f32 from vector<1x1x1xf32>
    %20 = vector.broadcast %19 : f32 to vector<1x1xf32>
    %c0_7 = arith.constant 0 : index
    %c0_8 = arith.constant 0 : index
    %21 = vector.load %arg3[%c0_7, %c0_8] : memref<1x1xf32, #tpu.memory_space<vmem>>, vector<1x1xf32>
    tpu.vector_store %arg3[%c0_7, %c0_8], %20 {strides = array<i32>} : memref<1x1xf32, #tpu.memory_space<vmem>>, vector<1x1xf32>,
    return
  }
  func.func @transform_0(%arg0: i32) -> (i32, i32) {
    %c0_i32 = arith.constant 0 : i32
    %c0_i32_0 = arith.constant 0 : i32
    return %arg0, %c0_i32 : i32, i32
  }
  func.func @transform_1(%arg0: i32) -> (i32, i32) {
    %c0_i32 = arith.constant 0 : i32
    %c0_i32_0 = arith.constant 0 : i32
    return %arg0, %c0_i32 : i32, i32
  }
  func.func @transform_2(%arg0: i32) -> (i32, i32) {
    %c0_i32 = arith.constant 0 : i32
    %c0_i32_0 = arith.constant 0 : i32
    return %arg0, %c0_i32 : i32, i32
  }
}

</mosaic_0001>

<llo_original>
// kernel: tpu_custom_call.1
$region0: #{tpu_custom_call.1}
  #allocation0 [shape = 'u32[]', space=smem, size = 0x4, offset = 0x4, fixed_abs, tag = 'smem constant byte address 0x4 - core index']
  #allocation1 [shape = 'u32[72,128]{1,0:T(1,128)}', space=vmem, size = 0x9000, scoped, tag = 'internal scratch']
  %s0 = inlined_call_operand.hbm [shape: f32[8,128], index: 0, kind: input, shape index: {}]
  %s1 = inlined_call_operand.hbm [shape: f32[8,128], index: 1, kind: input, shape index: {}]
  %s2 = inlined_call_operand.hbm [shape: f32[1,1], index: 2, kind: output, shape index: {}]
  %s3 = sld [smem:[#allocation0]]
  $region26: #{tpu_custom_call.1} parent=0
    _
  %s5 = ssub.s32 1, %s3
  %s6 = scalar_select 0, %s5, %s3
  $region1: #{tpu_custom_call.1} parent=0
    #allocation2 [shape = 'u8[4096]{0}', space=vmem, size = 0x1000, scoped, tag = 'input window, operand 0, single buffered']
    #allocation3 [shape = 's32[1]{0}', space=sflag, size = 0x4, scoped, tag = 'scoped memory for tpu_custom_call.1']
    #allocation4 [shape = 's32[1]{0}', space=sflag, size = 0x4, scoped, tag = 'scoped memory for tpu_custom_call.1']
    #allocation5 [shape = 'u8[4096]{0}', space=vmem, size = 0x1000, scoped, tag = 'input window, operand 1, single buffered']
    #allocation6 [shape = 's32[1]{0}', space=sflag, size = 0x4, scoped, tag = 'scoped memory for tpu_custom_call.1']
    #allocation7 [shape = 'u8[512]{0}', space=vmem, size = 0x400, scoped, tag = 'output window, operand 0, single buffered']
    %7 = vsyncpa [#allocation3], 0
    %8 = vsyncpa [#allocation6], 0
    %9 = vsyncpa [#allocation4], 0
    // Predicated region
    $region2: #{tpu_custom_call.1} parent=1 // pred_check
      _
    $region3: #{tpu_custom_call.1} parent=1 // pred_check_branch
      %11 = sbr.rel (0) target = $region5
    $region4: #{tpu_custom_call.1} parent=1 // pred_region
      %13 = vsyncadd [#allocation3], 0
      %s15 = sshll.u32 %s0, 4
      %s16 = int_to_ptr.hbm [resolvable:$true] %s15
      %s17 = sshll.u32 [#allocation2], 4
      %s18 = int_to_ptr.vmem [resolvable:$true] %s17
      %20 = dma.hbm_to_vmem [thread:$0]  %s16, 128, %s18, [#allocation3]
    $region5: #{tpu_custom_call.1} parent=1 // pred_fallthru
      _
    // Predicated region
    $region6: #{tpu_custom_call.1} parent=1 // pred_check
      _
    $region7: #{tpu_custom_call.1} parent=1 // pred_check_branch
      %22 = sbr.rel (0) target = $region9
    $region8: #{tpu_custom_call.1} parent=1 // pred_region
      %24 = vsyncadd [#allocation6], 0
      %s26 = sshll.u32 %s1, 4
      %s27 = int_to_ptr.hbm [resolvable:$true] %s26
      %s28 = sshll.u32 [#allocation5], 4
      %s29 = int_to_ptr.vmem [resolvable:$true] %s28
      %31 = dma.hbm_to_vmem [thread:$0]  %s27, 128, %s29, [#allocation6]
    $region9: #{tpu_custom_call.1} parent=1 // pred_fallthru
      _
    // Predicated region
    $region10: #{tpu_custom_call.1} parent=1 // pred_check
      _
    $region11: #{tpu_custom_call.1} parent=1 // pred_check_branch
      %33 = sbr.rel (0) target = $region13
    $region12: #{tpu_custom_call.1} parent=1 // pred_region
      %35 = dma.done [#allocation3], 128
    $region13: #{tpu_custom_call.1} parent=1 // pred_fallthru
      _
    // Predicated region
    $region14: #{tpu_custom_call.1} parent=1 // pred_check
      _
    $region15: #{tpu_custom_call.1} parent=1 // pred_check_branch
      %37 = sbr.rel (0) target = $region17
    $region16: #{tpu_custom_call.1} parent=1 // pred_region
      %39 = dma.done [#allocation6], 128
    $region17: #{tpu_custom_call.1} parent=1 // pred_fallthru
      _
    %v40 = vlaneseq
    %v41 = vshrl.u32 %v40, 7
    %s42 = smul.u32 0, 8
    %v43 = vstv %s42
    %v44 = vadd.s32 %v43, %v41
    %vm45 = vcmp.lt.s32.totalorder %v44, 8
    %v46 = vld [vmem:[#allocation2] sm:$0xff]
    %v47 = vld [vmem:[#allocation5] sm:$0xff]
    %v48 = vsub.f32 0.0, %v47
    %v49 = vadd.f32 %v46, 1e-06
    %v50 = vlog2.pop %v49
    %v51 = vmul.f32 %v50, 0.6931472
    %v52 = vmul.f32 %v48, %v51
    %v53 = vsel %vm45, %v52, 0.0
    %54 = vadd.xlane.f32.xlu0 %v53
    %v55 = vpop.xlane.xlu0 %54
    %v56 = vrot.slane %v55, 4
    %v57 = vadd.f32 %v55, %v56
    %v58 = vrot.slane %v57, 2
    %v59 = vadd.f32 %v57, %v58
    %v60 = vrot.slane %v59, 1
    %v61 = vadd.f32 %v59, %v60
    %s62 = vtos %v61
    %v63 = vstv %s62
    %vm64 = vcmask 0
    %65 = vst.msk [vmem:[#allocation7] sm:$0x1] %vm64, %v63
    // Predicated region
    $region18: #{tpu_custom_call.1} parent=1 // pred_check
      _
    $region19: #{tpu_custom_call.1} parent=1 // pred_check_branch
      %67 = sbr.rel (0) target = $region21
    $region20: #{tpu_custom_call.1} parent=1 // pred_region
      %69 = vsyncadd [#allocation4], 0
      %s71 = sshll.u32 [#allocation7], 4
      %s72 = int_to_ptr.vmem [resolvable:$true] %s71
      %s73 = sshll.u32 %s2, 4
      %s74 = int_to_ptr.hbm [resolvable:$true] %s73
      %76 = dma.vmem_to_hbm [thread:$0]  %s72, 16, %s74, [#allocation4]
    $region21: #{tpu_custom_call.1} parent=1 // pred_fallthru
      _
    // Predicated region
    $region22: #{tpu_custom_call.1} parent=1 // pred_check
      _
    $region23: #{tpu_custom_call.1} parent=1 // pred_check_branch
      %78 = sbr.rel (0) target = $region25
    $region24: #{tpu_custom_call.1} parent=1 // pred_region
      %80 = dma.done [#allocation4], 16
    $region25: #{tpu_custom_call.1} parent=1 // pred_fallthru
      _
    %81 = vsyncpa [#allocation3], 1
    %82 = vsyncpa [#allocation6], 1
    %83 = vsyncpa [#allocation4], 1

</llo_original>
